<compile_context>
chip_gen: v7x
topology: tpu7x:2x2x1
jax: 0.10.0
libtpu: 0.0.40
codegen_flags: <defaults>
</compile_context>

<pallas_src>
import jax
import jax.numpy as jnp
from jax.experimental import pallas as pl
from jax.experimental.pallas import tpu as pltpu
from functools import reduce, partial

product = partial(reduce, lambda x, y: x * y)

LANE = 128
SUBLANE_BF16 = 16


def _round_up(x, m):
    return ((x + m - 1) // m) * m


def mlp_kernel(x_ref, w1_ref, b1_ref, w2_ref, b2_ref, o_ref):
    # x_ref:  [TB, D]  bf16    w1_ref: [D, H]   bf16    b1_ref: [1, H]  f32
    # w2_ref: [H, Cp]  bf16    b2_ref: [1, Cp]  f32     o_ref:  [TB, Cp] f32
    h = jnp.dot(x_ref[...], w1_ref[...], preferred_element_type=jnp.float32)
    h = jnp.maximum(h + b1_ref[...], 0.0)                 # bias + ReLU in f32
    out = jnp.dot(h.astype(jnp.bfloat16), w2_ref[...],
                  preferred_element_type=jnp.float32)
    o_ref[...] = out + b2_ref[...]


def mlp_classifier_forward(x, w1, b1, w2, b2):
    """x: [B, C, H, W] float32. Returns logits [B, num_classes] float32."""
    B = x.shape[0]
    D = product(x.shape[1:])
    H = w1.shape[1]
    C = w2.shape[1]

    x_flat = x.reshape(B, D)                 # same row-major order as nn.Flatten

    # Batch tiling: large batches use 256-row tiles pipelined over the grid;
    # tiny batches pad to a bf16 sublane multiple (single grid step).
    TB = 256 if B >= 256 else _round_up(B, SUBLANE_BF16)
    Bp = _round_up(B, TB)
    Cp = _round_up(max(C, LANE), LANE)       # lane-dense output / w2 N-dim

    # bf16 weights & activations (HBM-bandwidth win), zero-padded to tile sizes.
    x_p = jnp.pad(x_flat.astype(jnp.bfloat16), ((0, Bp - B), (0, 0)))
    w1_b = w1.astype(jnp.bfloat16)
    w2_p = jnp.pad(w2.astype(jnp.bfloat16), ((0, 0), (0, Cp - C)))
    b1_r = b1.reshape(1, H).astype(jnp.float32)
    b2_p = jnp.pad(b2.reshape(1, C).astype(jnp.float32), ((0, 0), (0, Cp - C)))

    grid = (Bp // TB,)

    cost = pl.CostEstimate(
        flops=2 * Bp * D * H + 2 * Bp * H * Cp,
        transcendentals=0,
        bytes_accessed=(x_p.size * 2 + w1_b.size * 2 + w2_p.size * 2
                        + (b1_r.size + b2_p.size) * 4 + Bp * Cp * 4),
    )

    out_p = pl.pallas_call(
        mlp_kernel,
        out_shape=jax.ShapeDtypeStruct((Bp, Cp), jnp.float32),
        grid=grid,
        in_specs=[
            pl.BlockSpec((TB, D), lambda i: (i, 0)),    # batch-tiled activations
            pl.BlockSpec((D, H), lambda i: (0, 0)),     # w1 resident across grid
            pl.BlockSpec((1, H), lambda i: (0, 0)),     # b1 resident
            pl.BlockSpec((H, Cp), lambda i: (0, 0)),    # w2 (lane-padded) resident
            pl.BlockSpec((1, Cp), lambda i: (0, 0)),    # b2 (lane-padded) resident
        ],
        out_specs=pl.BlockSpec((TB, Cp), lambda i: (i, 0)),
        compiler_params=pltpu.CompilerParams(
            dimension_semantics=("parallel",)),         # both TCs on v7x
        cost_estimate=cost,
    )(x_p, w1_b, b1_r, w2_p, b2_p)

    return out_p[:B, :C]


def init_params(key, input_size, num_classes, hidden=128):
    """Deterministic init mirroring torch.nn.Linear default (uniform +/- 1/sqrt(fan_in))."""
    D = product(input_size)
    k1, k2, k3, k4 = jax.random.split(key, 4)
    bound1 = 1.0 / jnp.sqrt(D)
    bound2 = 1.0 / jnp.sqrt(hidden)
    w1 = jax.random.uniform(k1, (D, hidden), jnp.float32, -bound1, bound1)
    b1 = jax.random.uniform(k2, (hidden,), jnp.float32, -bound1, bound1)
    w2 = jax.random.uniform(k3, (hidden, num_classes), jnp.float32, -bound2, bound2)
    b2 = jax.random.uniform(k4, (num_classes,), jnp.float32, -bound2, bound2)
    return w1, b1, w2, b2


if __name__ == "__main__":
    key = jax.random.PRNGKey(0)
    kx, kp = jax.random.split(key)

    input_size = (4, 16, 16)   # (C, H, W) -> D = 1024
    num_classes = 10
    batch = 2

    x = jax.random.normal(kx, (batch,) + input_size, dtype=jnp.float32)
    w1, b1, w2, b2 = init_params(kp, input_size, num_classes)

    logits = mlp_classifier_forward(x, w1, b1, w2, b2)
    logits = jax.block_until_ready(logits)

    # Reference in plain JAX using the same bf16-cast inputs / f32 accumulation
    # the kernel uses (kernel keeps f32 accumulation via preferred_element_type).
    x_bf = x.reshape(batch, -1).astype(jnp.bfloat16).astype(jnp.float32)
    w1_bf = w1.astype(jnp.bfloat16).astype(jnp.float32)
    w2_bf = w2.astype(jnp.bfloat16).astype(jnp.float32)
    hp = jax.lax.Precision.HIGHEST
    h_ref = jnp.maximum(jnp.dot(x_bf, w1_bf, precision=hp) + b1, 0.0)
    h_ref = h_ref.astype(jnp.bfloat16).astype(jnp.float32)
    ref = jnp.dot(h_ref, w2_bf, precision=hp) + b2

    assert logits.shape == (batch, num_classes)
    assert jnp.allclose(logits, ref, atol=2e-2, rtol=2e-2)

    print("KERNEL_OK")
</pallas_src>

<mosaic_0001>
module attributes {stable_mosaic.version = 11 : i64} {
  func.func @mlp_kernel(%arg0: i32, %arg1: memref<16x1024xbf16, #tpu.memory_space<vmem>>, %arg2: memref<1024x128xbf16, #tpu.memory_space<vmem>>, %arg3: memref<1x128xf32, #tpu.memory_space<vmem>>, %arg4: memref<128x128xbf16, #tpu.memory_space<vmem>>, %arg5: memref<1x128xf32, #tpu.memory_space<vmem>>, %arg6: memref<16x128xf32, #tpu.memory_space<vmem>>) attributes {dimension_semantics = [#tpu.dimension_semantics<parallel>], iteration_bounds = array<i64: 1>, scalar_prefetch = 0 : i64, scratch_operands = 0 : i64, tpu.core_type = #tpu.core_type<tc>, window_params = [{transform_indices = @transform_0, window_bounds = array<i64: 16, 1024>}, {pipeline_mode = #tpu.pipeline_mode<synchronous>, transform_indices = @transform_1, window_bounds = array<i64: 1024, 128>}, {pipeline_mode = #tpu.pipeline_mode<synchronous>, transform_indices = @transform_2, window_bounds = array<i64: 1, 128>}, {pipeline_mode = #tpu.pipeline_mode<synchronous>, transform_indices = @transform_3, window_bounds = array<i64: 128, 128>}, {pipeline_mode = #tpu.pipeline_mode<synchronous>, transform_indices = @transform_4, window_bounds = array<i64: 1, 128>}, {transform_indices = @transform_5, window_bounds = array<i64: 16, 128>}]} {
    %c0 = arith.constant 0 : index
    %c0_0 = arith.constant 0 : index
    %0 = vector.load %arg1[%c0, %c0_0] : memref<16x1024xbf16, #tpu.memory_space<vmem>>, vector<16x1024xbf16>
    %c0_1 = arith.constant 0 : index
    %c0_2 = arith.constant 0 : index
    %1 = vector.load %arg2[%c0_1, %c0_2] : memref<1024x128xbf16, #tpu.memory_space<vmem>>, vector<1024x128xbf16>
    %cst = arith.constant dense<0.000000e+00> : vector<16x128xf32>
    %2 = tpu.matmul %0, %1, %cst {dimension_numbers = #tpu.dot_dimension_numbers<[1], [0], [0], [1], [0, 0, 1, 1], [], []>} : vector<16x1024xbf16>, vector<1024x128xbf16>, vector<16x128xf32> -> vector<16x128xf32>
    %c0_3 = arith.constant 0 : index
    %c0_4 = arith.constant 0 : index
    %3 = vector.load %arg3[%c0_3, %c0_4] : memref<1x128xf32, #tpu.memory_space<vmem>>, vector<1x128xf32>
    %4 = vector.broadcast %3 : vector<1x128xf32> to vector<16x128xf32>
    %5 = arith.addf %2, %4 : vector<16x128xf32>
    %cst_5 = arith.constant 0.000000e+00 : f32
    %6 = vector.broadcast %cst_5 : f32 to vector<16x128xf32>
    %7 = arith.maximumf %5, %6 : vector<16x128xf32>
    %8 = arith.truncf %7 : vector<16x128xf32> to vector<16x128xbf16>
    %c0_6 = arith.constant 0 : index
    %c0_7 = arith.constant 0 : index
    %9 = vector.load %arg4[%c0_6, %c0_7] : memref<128x128xbf16, #tpu.memory_space<vmem>>, vector<128x128xbf16>
    %cst_8 = arith.constant dense<0.000000e+00> : vector<16x128xf32>
    %10 = tpu.matmul %8, %9, %cst_8 {dimension_numbers = #tpu.dot_dimension_numbers<[1], [0], [0], [1], [0, 0, 1, 1], [], []>} : vector<16x128xbf16>, vector<128x128xbf16>, vector<16x128xf32> -> vector<16x128xf32>
    %c0_9 = arith.constant 0 : index
    %c0_10 = arith.constant 0 : index
    %11 = vector.load %arg5[%c0_9, %c0_10] : memref<1x128xf32, #tpu.memory_space<vmem>>, vector<1x128xf32>
    %12 = vector.broadcast %11 : vector<1x128xf32> to vector<16x128xf32>
    %13 = arith.addf %10, %12 : vector<16x128xf32>
    %c0_11 = arith.constant 0 : index
    %c0_12 = arith.constant 0 : index
    %14 = vector.load %arg6[%c0_11, %c0_12] : memref<16x128xf32, #tpu.memory_space<vmem>>, vector<16x128xf32>
    tpu.vector_store %arg6[%c0_11, %c0_12], %13 {strides = array<i32>} : memref<16x128xf32, #tpu.memory_space<vmem>>, vector<16x128xf32>,
    return
  }
  func.func @transform_0(%arg0: i32) -> (i32, i32) {
    %c0_i32 = arith.constant 0 : i32
    %c0_i32_0 = arith.constant 0 : i32
    return %arg0, %c0_i32 : i32, i32
  }
  func.func @transform_1(%arg0: i32) -> (i32, i32) {
    %c0_i32 = arith.constant 0 : i32
    %c0_i32_0 = arith.constant 0 : i32
    %c0_i32_1 = arith.constant 0 : i32
    return %c0_i32, %c0_i32_0 : i32, i32
  }
  func.func @transform_2(%arg0: i32) -> (i32, i32) {
    %c0_i32 = arith.constant 0 : i32
    %c0_i32_0 = arith.constant 0 : i32
    %c0_i32_1 = arith.constant 0 : i32
    return %c0_i32, %c0_i32_0 : i32, i32
  }
  func.func @transform_3(%arg0: i32) -> (i32, i32) {
    %c0_i32 = arith.constant 0 : i32
    %c0_i32_0 = arith.constant 0 : i32
    %c0_i32_1 = arith.constant 0 : i32
    return %c0_i32, %c0_i32_0 : i32, i32
  }
  func.func @transform_4(%arg0: i32) -> (i32, i32) {
    %c0_i32 = arith.constant 0 : i32
    %c0_i32_0 = arith.constant 0 : i32
    %c0_i32_1 = arith.constant 0 : i32
    return %c0_i32, %c0_i32_0 : i32, i32
  }
  func.func @transform_5(%arg0: i32) -> (i32, i32) {
    %c0_i32 = arith.constant 0 : i32
    %c0_i32_0 = arith.constant 0 : i32
    return %arg0, %c0_i32 : i32, i32
  }
}

</mosaic_0001>

<llo_original>
// kernel: tpu_custom_call.1
$region0: #{tpu_custom_call.1}
  #allocation0 [shape = 'u32[]', space=smem, size = 0x4, offset = 0x4, fixed_abs, tag = 'smem constant byte address 0x4 - core index']
  #allocation1 [shape = 'u32[144,128]{1,0:T(1,128)}', space=vmem, size = 0x12000, scoped, tag = 'internal scratch']
  %s0 = inlined_call_operand.hbm [shape: bf16[16,1024], index: 0, kind: input, shape index: {}]
  %s1 = inlined_call_operand.hbm [shape: bf16[1024,128], index: 1, kind: input, shape index: {}]
  %s2 = inlined_call_operand.vmem [shape: f32[1,128], index: 2, kind: input, shape index: {}]
  %s3 = inlined_call_operand.hbm [shape: bf16[128,128], index: 3, kind: input, shape index: {}]
  %s4 = inlined_call_operand.vmem [shape: f32[1,128], index: 4, kind: input, shape index: {}]
  %s5 = inlined_call_operand.hbm [shape: f32[16,128], index: 5, kind: output, shape index: {}]
  %s6 = sld [smem:[#allocation0]]
  $region42: #{tpu_custom_call.1} parent=0
    _
  %s8 = ssub.s32 1, %s6
  %s9 = scalar_select 0, %s8, %s6
  $region1: #{tpu_custom_call.1} parent=0
    #allocation2 [shape = 'u8[32768]{0}', space=vmem, size = 0x8000, scoped, tag = 'input window, operand 0, single buffered']
    #allocation3 [shape = 's32[1]{0}', space=sflag, size = 0x4, scoped, tag = 'scoped memory for tpu_custom_call.1']
    #allocation4 [shape = 's32[1]{0}', space=sflag, size = 0x4, scoped, tag = 'scoped memory for tpu_custom_call.1']
    #allocation5 [shape = 'u8[262144]{0}', space=vmem, size = 0x40000, scoped, tag = 'input window, operand 1, single buffered']
    #allocation6 [shape = 's32[1]{0}', space=sflag, size = 0x4, scoped, tag = 'scoped memory for tpu_custom_call.1']
    #allocation7 [shape = 'u8[32768]{0}', space=vmem, size = 0x8000, scoped, tag = 'input window, operand 3, single buffered']
    #allocation8 [shape = 'u8[8192]{0}', space=vmem, size = 0x2000, scoped, tag = 'output window, operand 0, single buffered']
    %10 = vsyncpa [#allocation3], 0
    %11 = vsyncpa [#allocation6], 0
    %12 = vsyncpa [#allocation4], 0
    // Predicated region
    $region2: #{tpu_custom_call.1} parent=1 // pred_check
      _
    $region3: #{tpu_custom_call.1} parent=1 // pred_check_branch
      %14 = sbr.rel (0) target = $region5
    $region4: #{tpu_custom_call.1} parent=1 // pred_region
      %s16 = ssub.s32 1024, 1024
      %17 = vsyncadd [#allocation3], %s16
      %s18 = sshll.u32 [#allocation2], 4
      %s19 = int_to_ptr.vmem [resolvable:$true] %s18
      %24 = dma.hbm_to_vmem [thread:$0]  %s0, 1024, %s19, [#allocation3], 512, 512, 32
    $region5: #{tpu_custom_call.1} parent=1 // pred_fallthru
      _
    // Predicated region
    $region6: #{tpu_custom_call.1} parent=1 // pred_check
      _
    $region7: #{tpu_custom_call.1} parent=1 // pred_check_branch
      %26 = sbr.rel (0) target = $region9
    $region8: #{tpu_custom_call.1} parent=1 // pred_region
      %s28 = ssub.s32 8192, 8192
      %29 = vsyncadd [#allocation6], %s28
      %s30 = sshll.u32 [#allocation5], 4
      %s31 = int_to_ptr.vmem [resolvable:$true] %s30
      %36 = dma.hbm_to_vmem [thread:$0]  %s1, 8192, %s31, [#allocation6], 64, 64, 4
    $region9: #{tpu_custom_call.1} parent=1 // pred_fallthru
      _
    // Predicated region
    $region10: #{tpu_custom_call.1} parent=1 // pred_check
      _
    $region11: #{tpu_custom_call.1} parent=1 // pred_check_branch
      %38 = sbr.rel (0) target = $region13
    $region12: #{tpu_custom_call.1} parent=1 // pred_region
      _
    $region13: #{tpu_custom_call.1} parent=1 // pred_fallthru
      _
    // Predicated region
    $region14: #{tpu_custom_call.1} parent=1 // pred_check
      _
    $region15: #{tpu_custom_call.1} parent=1 // pred_check_branch
      %40 = sbr.rel (0) target = $region17
    $region16: #{tpu_custom_call.1} parent=1 // pred_region
      %s42 = ssub.s32 1024, 1024
      %43 = vsyncadd [#allocation6], %s42
      %s44 = sshll.u32 [#allocation7], 4
      %s45 = int_to_ptr.vmem [resolvable:$true] %s44
      %50 = dma.hbm_to_vmem [thread:$0]  %s3, 1024, %s45, [#allocation6], 64, 64, 4
    $region17: #{tpu_custom_call.1} parent=1 // pred_fallthru
      _
    // Predicated region
    $region18: #{tpu_custom_call.1} parent=1 // pred_check
      _
    $region19: #{tpu_custom_call.1} parent=1 // pred_check_branch
      %52 = sbr.rel (0) target = $region21
    $region20: #{tpu_custom_call.1} parent=1 // pred_region
      _
    $region21: #{tpu_custom_call.1} parent=1 // pred_fallthru
      _
    // Predicated region
    $region22: #{tpu_custom_call.1} parent=1 // pred_check
      _
    $region23: #{tpu_custom_call.1} parent=1 // pred_check_branch
      %54 = sbr.rel (0) target = $region25
    $region24: #{tpu_custom_call.1} parent=1 // pred_region
      %55 = dma.done [#allocation3], 1024
    $region25: #{tpu_custom_call.1} parent=1 // pred_fallthru
      _
    // Predicated region
    $region26: #{tpu_custom_call.1} parent=1 // pred_check
      _
    $region27: #{tpu_custom_call.1} parent=1 // pred_check_branch
      %57 = sbr.rel (0) target = $region29
    $region28: #{tpu_custom_call.1} parent=1 // pred_region
      %58 = dma.done [#allocation6], 8192
    $region29: #{tpu_custom_call.1} parent=1 // pred_fallthru
      _
    // Predicated region
    $region30: #{tpu_custom_call.1} parent=1 // pred_check
      _
    $region31: #{tpu_custom_call.1} parent=1 // pred_check_branch
      %60 = sbr.rel (0) target = $region33
    $region32: #{tpu_custom_call.1} parent=1 // pred_region
      %61 = dma.done [#allocation6], 1024
    $region33: #{tpu_custom_call.1} parent=1 // pred_fallthru
      _
    %v63 = vld [vmem:[#allocation2] sm:$0xff]
    %v64 = vld [vmem:[#allocation2 + $0x8] sm:$0xff]
    %v65 = vld [vmem:[#allocation2 + $0x10] sm:$0xff]
    %v66 = vld [vmem:[#allocation2 + $0x18] sm:$0xff]
    %v67 = vld [vmem:[#allocation2 + $0x20] sm:$0xff]
    %v68 = vld [vmem:[#allocation2 + $0x28] sm:$0xff]
    %v69 = vld [vmem:[#allocation2 + $0x30] sm:$0xff]
    %v70 = vld [vmem:[#allocation2 + $0x38] sm:$0xff]
    %v71 = vld [vmem:[#allocation5] sm:$0xf]
    %v72 = vld [vmem:[#allocation5 + $0x4] sm:$0xf]
    %v73 = vld [vmem:[#allocation5 + $0x8] sm:$0xf]
    %v74 = vld [vmem:[#allocation5 + $0xc] sm:$0xf]
    %v75 = vld [vmem:[#allocation5 + $0x10] sm:$0xf]
    %v76 = vld [vmem:[#allocation5 + $0x14] sm:$0xf]
    %v77 = vld [vmem:[#allocation5 + $0x18] sm:$0xf]
    %v78 = vld [vmem:[#allocation5 + $0x1c] sm:$0xf]
    %v79 = vld [vmem:[#allocation5 + $0x20] sm:$0xf]
    %v80 = vld [vmem:[#allocation5 + $0x24] sm:$0xf]
    %v81 = vld [vmem:[#allocation5 + $0x28] sm:$0xf]
    %v82 = vld [vmem:[#allocation5 + $0x2c] sm:$0xf]
    %v83 = vld [vmem:[#allocation5 + $0x30] sm:$0xf]
    %v84 = vld [vmem:[#allocation5 + $0x34] sm:$0xf]
    %v85 = vld [vmem:[#allocation5 + $0x38] sm:$0xf]
    %v86 = vld [vmem:[#allocation5 + $0x3c] sm:$0xf]
    %v87 = vld [vmem:[#allocation5 + $0x40] sm:$0xf]
    %v88 = vld [vmem:[#allocation5 + $0x44] sm:$0xf]
    %v89 = vld [vmem:[#allocation5 + $0x48] sm:$0xf]
    %v90 = vld [vmem:[#allocation5 + $0x4c] sm:$0xf]
    %v91 = vld [vmem:[#allocation5 + $0x50] sm:$0xf]
    %v92 = vld [vmem:[#allocation5 + $0x54] sm:$0xf]
    %v93 = vld [vmem:[#allocation5 + $0x58] sm:$0xf]
    %v94 = vld [vmem:[#allocation5 + $0x5c] sm:$0xf]
    %v95 = vld [vmem:[#allocation5 + $0x60] sm:$0xf]
    %v96 = vld [vmem:[#allocation5 + $0x64] sm:$0xf]
    %v97 = vld [vmem:[#allocation5 + $0x68] sm:$0xf]
    %v98 = vld [vmem:[#allocation5 + $0x6c] sm:$0xf]
    %v99 = vld [vmem:[#allocation5 + $0x70] sm:$0xf]
    %v100 = vld [vmem:[#allocation5 + $0x74] sm:$0xf]
    %v101 = vld [vmem:[#allocation5 + $0x78] sm:$0xf]
    %v102 = vld [vmem:[#allocation5 + $0x7c] sm:$0xf]
    %v103 = vld [vmem:[#allocation5 + $0x80] sm:$0xf]
    %v104 = vld [vmem:[#allocation5 + $0x84] sm:$0xf]
    %v105 = vld [vmem:[#allocation5 + $0x88] sm:$0xf]
    %v106 = vld [vmem:[#allocation5 + $0x8c] sm:$0xf]
    %v107 = vld [vmem:[#allocation5 + $0x90] sm:$0xf]
    %v108 = vld [vmem:[#allocation5 + $0x94] sm:$0xf]
    %v109 = vld [vmem:[#allocation5 + $0x98] sm:$0xf]
    %v110 = vld [vmem:[#allocation5 + $0x9c] sm:$0xf]
    %v111 = vld [vmem:[#allocation5 + $0xa0] sm:$0xf]
    %v112 = vld [vmem:[#allocation5 + $0xa4] sm:$0xf]
    %v113 = vld [vmem:[#allocation5 + $0xa8] sm:$0xf]
    %v114 = vld [vmem:[#allocation5 + $0xac] sm:$0xf]
    %v115 = vld [vmem:[#allocation5 + $0xb0] sm:$0xf]
    %v116 = vld [vmem:[#allocation5 + $0xb4] sm:$0xf]
    %v117 = vld [vmem:[#allocation5 + $0xb8] sm:$0xf]
    %v118 = vld [vmem:[#allocation5 + $0xbc] sm:$0xf]
    %v119 = vld [vmem:[#allocation5 + $0xc0] sm:$0xf]
    %v120 = vld [vmem:[#allocation5 + $0xc4] sm:$0xf]
    %v121 = vld [vmem:[#allocation5 + $0xc8] sm:$0xf]
    %v122 = vld [vmem:[#allocation5 + $0xcc] sm:$0xf]
    %v123 = vld [vmem:[#allocation5 + $0xd0] sm:$0xf]
    %v124 = vld [vmem:[#allocation5 + $0xd4] sm:$0xf]
    %v125 = vld [vmem:[#allocation5 + $0xd8] sm:$0xf]
    %v126 = vld [vmem:[#allocation5 + $0xdc] sm:$0xf]
    %v127 = vld [vmem:[#allocation5 + $0xe0] sm:$0xf]
    %v128 = vld [vmem:[#allocation5 + $0xe4] sm:$0xf]
    %v129 = vld [vmem:[#allocation5 + $0xe8] sm:$0xf]
    %v130 = vld [vmem:[#allocation5 + $0xec] sm:$0xf]
    %v131 = vld [vmem:[#allocation5 + $0xf0] sm:$0xf]
    %v132 = vld [vmem:[#allocation5 + $0xf4] sm:$0xf]
    %v133 = vld [vmem:[#allocation5 + $0xf8] sm:$0xf]
    %v134 = vld [vmem:[#allocation5 + $0xfc] sm:$0xf]
    %v135 = vld [vmem:[#allocation5 + $0x100] sm:$0xf]
    %v136 = vld [vmem:[#allocation5 + $0x104] sm:$0xf]
    %v137 = vld [vmem:[#allocation5 + $0x108] sm:$0xf]
    %v138 = vld [vmem:[#allocation5 + $0x10c] sm:$0xf]
    %v139 = vld [vmem:[#allocation5 + $0x110] sm:$0xf]
    %v140 = vld [vmem:[#allocation5 + $0x114] sm:$0xf]
    %v141 = vld [vmem:[#allocation5 + $0x118] sm:$0xf]
    %v142 = vld [vmem:[#allocation5 + $0x11c] sm:$0xf]
    %v143 = vld [vmem:[#allocation5 + $0x120] sm:$0xf]
    %v144 = vld [vmem:[#allocation5 + $0x124] sm:$0xf]
    %v145 = vld [vmem:[#allocation5 + $0x128] sm:$0xf]
    %v146 = vld [vmem:[#allocation5 + $0x12c] sm:$0xf]
    %v147 = vld [vmem:[#allocation5 + $0x130] sm:$0xf]
    %v148 = vld [vmem:[#allocation5 + $0x134] sm:$0xf]
    %v149 = vld [vmem:[#allocation5 + $0x138] sm:$0xf]
    %v150 = vld [vmem:[#allocation5 + $0x13c] sm:$0xf]
    %v151 = vld [vmem:[#allocation5 + $0x140] sm:$0xf]
    %v152 = vld [vmem:[#allocation5 + $0x144] sm:$0xf]
    %v153 = vld [vmem:[#allocation5 + $0x148] sm:$0xf]
    %v154 = vld [vmem:[#allocation5 + $0x14c] sm:$0xf]
    %v155 = vld [vmem:[#allocation5 + $0x150] sm:$0xf]
    %v156 = vld [vmem:[#allocation5 + $0x154] sm:$0xf]
    %v157 = vld [vmem:[#allocation5 + $0x158] sm:$0xf]
    %v158 = vld [vmem:[#allocation5 + $0x15c] sm:$0xf]
    %v159 = vld [vmem:[#allocation5 + $0x160] sm:$0xf]
    %v160 = vld [vmem:[#allocation5 + $0x164] sm:$0xf]
    %v161 = vld [vmem:[#allocation5 + $0x168] sm:$0xf]
    %v162 = vld [vmem:[#allocation5 + $0x16c] sm:$0xf]
    %v163 = vld [vmem:[#allocation5 + $0x170] sm:$0xf]
    %v164 = vld [vmem:[#allocation5 + $0x174] sm:$0xf]
    %v165 = vld [vmem:[#allocation5 + $0x178] sm:$0xf]
    %v166 = vld [vmem:[#allocation5 + $0x17c] sm:$0xf]
    %v167 = vld [vmem:[#allocation5 + $0x180] sm:$0xf]
    %v168 = vld [vmem:[#allocation5 + $0x184] sm:$0xf]
    %v169 = vld [vmem:[#allocation5 + $0x188] sm:$0xf]
    %v170 = vld [vmem:[#allocation5 + $0x18c] sm:$0xf]
    %v171 = vld [vmem:[#allocation5 + $0x190] sm:$0xf]
    %v172 = vld [vmem:[#allocation5 + $0x194] sm:$0xf]
    %v173 = vld [vmem:[#allocation5 + $0x198] sm:$0xf]
    %v174 = vld [vmem:[#allocation5 + $0x19c] sm:$0xf]
    %v175 = vld [vmem:[#allocation5 + $0x1a0] sm:$0xf]
    %v176 = vld [vmem:[#allocation5 + $0x1a4] sm:$0xf]
    %v177 = vld [vmem:[#allocation5 + $0x1a8] sm:$0xf]
    %v178 = vld [vmem:[#allocation5 + $0x1ac] sm:$0xf]
    %v179 = vld [vmem:[#allocation5 + $0x1b0] sm:$0xf]
    %v180 = vld [vmem:[#allocation5 + $0x1b4] sm:$0xf]
    %v181 = vld [vmem:[#allocation5 + $0x1b8] sm:$0xf]
    %v182 = vld [vmem:[#allocation5 + $0x1bc] sm:$0xf]
    %v183 = vld [vmem:[#allocation5 + $0x1c0] sm:$0xf]
    %v184 = vld [vmem:[#allocation5 + $0x1c4] sm:$0xf]
    %v185 = vld [vmem:[#allocation5 + $0x1c8] sm:$0xf]
    %v186 = vld [vmem:[#allocation5 + $0x1cc] sm:$0xf]
    %v187 = vld [vmem:[#allocation5 + $0x1d0] sm:$0xf]
    %v188 = vld [vmem:[#allocation5 + $0x1d4] sm:$0xf]
    %v189 = vld [vmem:[#allocation5 + $0x1d8] sm:$0xf]
    %v190 = vld [vmem:[#allocation5 + $0x1dc] sm:$0xf]
    %v191 = vld [vmem:[#allocation5 + $0x1e0] sm:$0xf]
    %v192 = vld [vmem:[#allocation5 + $0x1e4] sm:$0xf]
    %v193 = vld [vmem:[#allocation5 + $0x1e8] sm:$0xf]
    %v194 = vld [vmem:[#allocation5 + $0x1ec] sm:$0xf]
    %v195 = vld [vmem:[#allocation5 + $0x1f0] sm:$0xf]
    %v196 = vld [vmem:[#allocation5 + $0x1f4] sm:$0xf]
    %v197 = vld [vmem:[#allocation5 + $0x1f8] sm:$0xf]
    %v198 = vld [vmem:[#allocation5 + $0x1fc] sm:$0xf]
    %v199 = vld [vmem:[%s2] sm:$0x1]
    %v201 = vlaneseq
    %v202 = vshrl.u32 %v201, 7
    %v203 = vsub.s32 0, %v202
    %v204 = vrot.slane %v199, %v203
    %v214 = vunpack.c.l.b16 %v63
    %v215 = vunpack.c.h.b16 %v63
    %v216 = vunpack.c.l.b16 %v64
    %v217 = vunpack.c.h.b16 %v64
    %v218 = vunpack.c.l.b16 %v65
    %v219 = vunpack.c.h.b16 %v65
    %v220 = vunpack.c.l.b16 %v66
    %v221 = vunpack.c.h.b16 %v66
    %v222 = vunpack.c.l.b16 %v67
    %v223 = vunpack.c.h.b16 %v67
    %v224 = vunpack.c.l.b16 %v68
    %v225 = vunpack.c.h.b16 %v68
    %v226 = vunpack.c.l.b16 %v69
    %v227 = vunpack.c.h.b16 %v69
    %v228 = vunpack.c.l.b16 %v70
    %v229 = vunpack.c.h.b16 %v70
    %v230 = vpack.c.b16 %v222, %v214
    %v231 = vpack.c.b16 %v223, %v215
    %v232 = vpack.c.b16 %v224, %v216
    %v233 = vpack.c.b16 %v225, %v217
    %v234 = vpack.c.b16 %v226, %v218
    %v235 = vpack.c.b16 %v227, %v219
    %v236 = vpack.c.b16 %v228, %v220
    %v237 = vpack.c.b16 %v229, %v221
    %v374 = vunpack.c.l.b16 %v71
    %v375 = vunpack.c.l.b16 %v72
    %v376 = vunpack.c.l.b16 %v73
    %v377 = vunpack.c.l.b16 %v74
    %v378 = vunpack.c.l.b16 %v75
    %v379 = vunpack.c.l.b16 %v76
    %v380 = vunpack.c.l.b16 %v77
    %v381 = vunpack.c.l.b16 %v78
    %v382 = vunpack.c.l.b16 %v79
    %v383 = vunpack.c.l.b16 %v80
    %v384 = vunpack.c.l.b16 %v81
    %v385 = vunpack.c.l.b16 %v82
    %v386 = vunpack.c.l.b16 %v83
    %v387 = vunpack.c.l.b16 %v84
    %v388 = vunpack.c.l.b16 %v85
    %v389 = vunpack.c.l.b16 %v86
    %v390 = vunpack.c.l.b16 %v87
    %v391 = vunpack.c.l.b16 %v88
    %v392 = vunpack.c.l.b16 %v89
    %v393 = vunpack.c.l.b16 %v90
    %v394 = vunpack.c.l.b16 %v91
    %v395 = vunpack.c.l.b16 %v92
    %v396 = vunpack.c.l.b16 %v93
    %v397 = vunpack.c.l.b16 %v94
    %v398 = vunpack.c.l.b16 %v95
    %v399 = vunpack.c.l.b16 %v96
    %v400 = vunpack.c.l.b16 %v97
    %v401 = vunpack.c.l.b16 %v98
    %v402 = vunpack.c.l.b16 %v99
    %v403 = vunpack.c.l.b16 %v100
    %v404 = vunpack.c.l.b16 %v101
    %v405 = vunpack.c.l.b16 %v102
    %v406 = vunpack.c.l.b16 %v103
    %v407 = vunpack.c.l.b16 %v104
    %v408 = vunpack.c.l.b16 %v105
    %v409 = vunpack.c.l.b16 %v106
    %v410 = vunpack.c.l.b16 %v107
    %v411 = vunpack.c.l.b16 %v108
    %v412 = vunpack.c.l.b16 %v109
    %v413 = vunpack.c.l.b16 %v110
    %v414 = vunpack.c.l.b16 %v111
    %v415 = vunpack.c.l.b16 %v112
    %v416 = vunpack.c.l.b16 %v113
    %v417 = vunpack.c.l.b16 %v114
    %v418 = vunpack.c.l.b16 %v115
    %v419 = vunpack.c.l.b16 %v116
    %v420 = vunpack.c.l.b16 %v117
    %v421 = vunpack.c.l.b16 %v118
    %v422 = vunpack.c.l.b16 %v119
    %v423 = vunpack.c.l.b16 %v120
    %v424 = vunpack.c.l.b16 %v121
    %v425 = vunpack.c.l.b16 %v122
    %v426 = vunpack.c.l.b16 %v123
    %v427 = vunpack.c.l.b16 %v124
    %v428 = vunpack.c.l.b16 %v125
    %v429 = vunpack.c.l.b16 %v126
    %v430 = vunpack.c.l.b16 %v127
    %v431 = vunpack.c.l.b16 %v128
    %v432 = vunpack.c.l.b16 %v129
    %v433 = vunpack.c.l.b16 %v130
    %v434 = vunpack.c.l.b16 %v131
    %v435 = vunpack.c.l.b16 %v132
    %v436 = vunpack.c.l.b16 %v133
    %v437 = vunpack.c.l.b16 %v134
    %v438 = vunpack.c.l.b16 %v135
    %v439 = vunpack.c.l.b16 %v136
    %v440 = vunpack.c.l.b16 %v137
    %v441 = vunpack.c.l.b16 %v138
    %v442 = vunpack.c.l.b16 %v139
    %v443 = vunpack.c.l.b16 %v140
    %v444 = vunpack.c.l.b16 %v141
    %v445 = vunpack.c.l.b16 %v142
    %v446 = vunpack.c.l.b16 %v143
    %v447 = vunpack.c.l.b16 %v144
    %v448 = vunpack.c.l.b16 %v145
    %v449 = vunpack.c.l.b16 %v146
    %v450 = vunpack.c.l.b16 %v147
    %v451 = vunpack.c.l.b16 %v148
    %v452 = vunpack.c.l.b16 %v149
    %v453 = vunpack.c.l.b16 %v150
    %v454 = vunpack.c.l.b16 %v151
    %v455 = vunpack.c.l.b16 %v152
    %v456 = vunpack.c.l.b16 %v153
    %v457 = vunpack.c.l.b16 %v154
    %v458 = vunpack.c.l.b16 %v155
    %v459 = vunpack.c.l.b16 %v156
    %v460 = vunpack.c.l.b16 %v157
    %v461 = vunpack.c.l.b16 %v158
    %v462 = vunpack.c.l.b16 %v159
    %v463 = vunpack.c.l.b16 %v160
    %v464 = vunpack.c.l.b16 %v161
    %v465 = vunpack.c.l.b16 %v162
    %v466 = vunpack.c.l.b16 %v163
    %v467 = vunpack.c.l.b16 %v164
    %v468 = vunpack.c.l.b16 %v165
    %v469 = vunpack.c.l.b16 %v166
    %v470 = vunpack.c.l.b16 %v167
    %v471 = vunpack.c.l.b16 %v168
    %v472 = vunpack.c.l.b16 %v169
    %v473 = vunpack.c.l.b16 %v170
    %v474 = vunpack.c.l.b16 %v171
    %v475 = vunpack.c.l.b16 %v172
    %v476 = vunpack.c.l.b16 %v173
    %v477 = vunpack.c.l.b16 %v174
    %v478 = vunpack.c.l.b16 %v175
    %v479 = vunpack.c.l.b16 %v176
    %v480 = vunpack.c.l.b16 %v177
    %v481 = vunpack.c.l.b16 %v178
    %v482 = vunpack.c.l.b16 %v179
    %v483 = vunpack.c.l.b16 %v180
    %v484 = vunpack.c.l.b16 %v181
    %v485 = vunpack.c.l.b16 %v182
    %v486 = vunpack.c.l.b16 %v183
    %v487 = vunpack.c.l.b16 %v184
    %v488 = vunpack.c.l.b16 %v185
    %v489 = vunpack.c.l.b16 %v186
    %v490 = vunpack.c.l.b16 %v187
    %v491 = vunpack.c.l.b16 %v188
    %v492 = vunpack.c.l.b16 %v189
    %v493 = vunpack.c.l.b16 %v190
    %v494 = vunpack.c.l.b16 %v191
    %v495 = vunpack.c.l.b16 %v192
    %v496 = vunpack.c.l.b16 %v193
    %v497 = vunpack.c.l.b16 %v194
    %v498 = vunpack.c.l.b16 %v195
    %v499 = vunpack.c.l.b16 %v196
    %v500 = vunpack.c.l.b16 %v197
    %v501 = vunpack.c.l.b16 %v198
    %v502 = vpack.c.b16 %v375, %v374
    %v503 = vpack.c.b16 %v377, %v376
    %v504 = vpack.c.b16 %v379, %v378
    %v505 = vpack.c.b16 %v381, %v380
    %v506 = vpack.c.b16 %v383, %v382
    %v507 = vpack.c.b16 %v385, %v384
    %v508 = vpack.c.b16 %v387, %v386
    %v509 = vpack.c.b16 %v389, %v388
    %v510 = vpack.c.b16 %v391, %v390
    %v511 = vpack.c.b16 %v393, %v392
    %v512 = vpack.c.b16 %v395, %v394
    %v513 = vpack.c.b16 %v397, %v396
    %v514 = vpack.c.b16 %v399, %v398
    %v515 = vpack.c.b16 %v401, %v400
    %v516 = vpack.c.b16 %v403, %v402
    %v517 = vpack.c.b16 %v405, %v404
    %v518 = vpack.c.b16 %v407, %v406
    %v519 = vpack.c.b16 %v409, %v408
    %v520 = vpack.c.b16 %v411, %v410
    %v521 = vpack.c.b16 %v413, %v412
    %v522 = vpack.c.b16 %v415, %v414
    %v523 = vpack.c.b16 %v417, %v416
    %v524 = vpack.c.b16 %v419, %v418
    %v525 = vpack.c.b16 %v421, %v420
    %v526 = vpack.c.b16 %v423, %v422
    %v527 = vpack.c.b16 %v425, %v424
    %v528 = vpack.c.b16 %v427, %v426
    %v529 = vpack.c.b16 %v429, %v428
    %v530 = vpack.c.b16 %v431, %v430
    %v531 = vpack.c.b16 %v433, %v432
    %v532 = vpack.c.b16 %v435, %v434
    %v533 = vpack.c.b16 %v437, %v436
    %v534 = vpack.c.b16 %v439, %v438
    %v535 = vpack.c.b16 %v441, %v440
    %v536 = vpack.c.b16 %v443, %v442
    %v537 = vpack.c.b16 %v445, %v444
    %v538 = vpack.c.b16 %v447, %v446
    %v539 = vpack.c.b16 %v449, %v448
    %v540 = vpack.c.b16 %v451, %v450
    %v541 = vpack.c.b16 %v453, %v452
    %v542 = vpack.c.b16 %v455, %v454
    %v543 = vpack.c.b16 %v457, %v456
    %v544 = vpack.c.b16 %v459, %v458
    %v545 = vpack.c.b16 %v461, %v460
    %v546 = vpack.c.b16 %v463, %v462
    %v547 = vpack.c.b16 %v465, %v464
    %v548 = vpack.c.b16 %v467, %v466
    %v549 = vpack.c.b16 %v469, %v468
    %v550 = vpack.c.b16 %v471, %v470
    %v551 = vpack.c.b16 %v473, %v472
    %v552 = vpack.c.b16 %v475, %v474
    %v553 = vpack.c.b16 %v477, %v476
    %v554 = vpack.c.b16 %v479, %v478
    %v555 = vpack.c.b16 %v481, %v480
    %v556 = vpack.c.b16 %v483, %v482
    %v557 = vpack.c.b16 %v485, %v484
    %v558 = vpack.c.b16 %v487, %v486
    %v559 = vpack.c.b16 %v489, %v488
    %v560 = vpack.c.b16 %v491, %v490
    %v561 = vpack.c.b16 %v493, %v492
    %v562 = vpack.c.b16 %v495, %v494
    %v563 = vpack.c.b16 %v497, %v496
    %v564 = vpack.c.b16 %v499, %v498
    %v565 = vpack.c.b16 %v501, %v500
    %630 = vmatprep.subr.bf16.mxu0 0
    %631 = vmatpush1.bf16.msra.mxu0 %v502
    %632 = vmatprep.subr.bf16.mxu0 0
    %633 = vmatpush1.bf16.msra.mxu0 %v503
    %634 = vmatprep.subr.bf16.mxu0 0
    %635 = vmatpush1.bf16.msra.mxu0 %v504
    %636 = vmatprep.subr.bf16.mxu0 0
    %637 = vmatpush1.bf16.msra.mxu0 %v505
    %638 = vmatprep.subr.bf16.mxu0 0
    %639 = vmatpush1.bf16.msra.mxu0 %v506
    %640 = vmatprep.subr.bf16.mxu0 0
    %641 = vmatpush1.bf16.msra.mxu0 %v507
    %642 = vmatprep.subr.bf16.mxu0 0
    %643 = vmatpush1.bf16.msra.mxu0 %v508
    %644 = vmatprep.subr.bf16.mxu0 0
    %645 = vmatpush1.bf16.msra.mxu0 %v509
    %646 = vmatprep.subr.bf16.mxu0 0
    %647 = vmatpush1.bf16.msra.mxu0 %v510
    %648 = vmatprep.subr.bf16.mxu0 0
    %649 = vmatpush1.bf16.msra.mxu0 %v511
    %650 = vmatprep.subr.bf16.mxu0 0
    %651 = vmatpush1.bf16.msra.mxu0 %v512
    %652 = vmatprep.subr.bf16.mxu0 0
    %653 = vmatpush1.bf16.msra.mxu0 %v513
    %654 = vmatprep.subr.bf16.mxu0 0
    %655 = vmatpush1.bf16.msra.mxu0 %v514
    %656 = vmatprep.subr.bf16.mxu0 0
    %657 = vmatpush1.bf16.msra.mxu0 %v515
    %658 = vmatprep.subr.bf16.mxu0 0
    %659 = vmatpush1.bf16.msra.mxu0 %v516
    %660 = vmatprep.subr.bf16.mxu0 0
    %661 = vmatpush1.bf16.msra.mxu0 %v517
    %662 = vmatprep.mubr.bf16.mxu0 %v231
    %663 = vmatmul.mubr.bf16.gmra.mrb[0].mxu0 %v230
    %v664 = vpop.f32.mrb[0].mxu0
    %v665 = vadd.f32 %v204, %v664
    %v666 = vpop.f32.mrb[0].mxu0
    %v667 = vpop.f32.mrb[0].mxu0
    %v668 = vadd.f32 %v204, %v667
    %v669 = vpop.f32.mrb[0].mxu0
    %670 = vdwg.mxu0
    %671 = vmatprep.subr.bf16.mxu0 0
    %672 = vmatpush1.bf16.msra.mxu0 %v518
    %673 = vmatprep.subr.bf16.mxu0 0
    %674 = vmatpush1.bf16.msra.mxu0 %v519
    %675 = vmatprep.subr.bf16.mxu0 0
    %676 = vmatpush1.bf16.msra.mxu0 %v520
    %677 = vmatprep.subr.bf16.mxu0 0
    %678 = vmatpush1.bf16.msra.mxu0 %v521
    %679 = vmatprep.subr.bf16.mxu0 0
    %680 = vmatpush1.bf16.msra.mxu0 %v522
    %681 = vmatprep.subr.bf16.mxu0 0
    %682 = vmatpush1.bf16.msra.mxu0 %v523
    %683 = vmatprep.subr.bf16.mxu0 0
    %684 = vmatpush1.bf16.msra.mxu0 %v524
    %685 = vmatprep.subr.bf16.mxu0 0
    %686 = vmatpush1.bf16.msra.mxu0 %v525
    %687 = vmatprep.subr.bf16.mxu0 0
    %688 = vmatpush1.bf16.msra.mxu0 %v526
    %689 = vmatprep.subr.bf16.mxu0 0
    %690 = vmatpush1.bf16.msra.mxu0 %v527
    %691 = vmatprep.subr.bf16.mxu0 0
    %692 = vmatpush1.bf16.msra.mxu0 %v528
    %693 = vmatprep.subr.bf16.mxu0 0
    %694 = vmatpush1.bf16.msra.mxu0 %v529
    %695 = vmatprep.subr.bf16.mxu0 0
    %696 = vmatpush1.bf16.msra.mxu0 %v530
    %697 = vmatprep.subr.bf16.mxu0 0
    %698 = vmatpush1.bf16.msra.mxu0 %v531
    %699 = vmatprep.subr.bf16.mxu0 0
    %700 = vmatpush1.bf16.msra.mxu0 %v532
    %701 = vmatprep.subr.bf16.mxu0 0
    %702 = vmatpush1.bf16.msra.mxu0 %v533
    %703 = vmatprep.mubr.bf16.mxu0 %v233
    %704 = vmatmul.mubr.bf16.gmra.mrb[0].mxu0 %v232
    %v705 = vpop.f32.mrb[0].mxu0
    %v706 = vadd.f32 %v665, %v705
    %v707 = vpop.f32.mrb[0].mxu0
    %v708 = vpop.f32.mrb[0].mxu0
    %v709 = vadd.f32 %v668, %v708
    %v710 = vpop.f32.mrb[0].mxu0
    %711 = vdwg.mxu0
    %712 = vmatprep.subr.bf16.mxu0 0
    %713 = vmatpush1.bf16.msra.mxu0 %v534
    %714 = vmatprep.subr.bf16.mxu0 0
    %715 = vmatpush1.bf16.msra.mxu0 %v535
    %716 = vmatprep.subr.bf16.mxu0 0
    %717 = vmatpush1.bf16.msra.mxu0 %v536
    %718 = vmatprep.subr.bf16.mxu0 0
    %719 = vmatpush1.bf16.msra.mxu0 %v537
    %720 = vmatprep.subr.bf16.mxu0 0
    %721 = vmatpush1.bf16.msra.mxu0 %v538
    %722 = vmatprep.subr.bf16.mxu0 0
    %723 = vmatpush1.bf16.msra.mxu0 %v539
    %724 = vmatprep.subr.bf16.mxu0 0
    %725 = vmatpush1.bf16.msra.mxu0 %v540
    %726 = vmatprep.subr.bf16.mxu0 0
    %727 = vmatpush1.bf16.msra.mxu0 %v541
    %728 = vmatprep.subr.bf16.mxu0 0
    %729 = vmatpush1.bf16.msra.mxu0 %v542
    %730 = vmatprep.subr.bf16.mxu0 0
    %731 = vmatpush1.bf16.msra.mxu0 %v543
    %732 = vmatprep.subr.bf16.mxu0 0
    %733 = vmatpush1.bf16.msra.mxu0 %v544
    %734 = vmatprep.subr.bf16.mxu0 0
    %735 = vmatpush1.bf16.msra.mxu0 %v545
    %736 = vmatprep.subr.bf16.mxu0 0
    %737 = vmatpush1.bf16.msra.mxu0 %v546
    %738 = vmatprep.subr.bf16.mxu0 0
    %739 = vmatpush1.bf16.msra.mxu0 %v547
    %740 = vmatprep.subr.bf16.mxu0 0
    %741 = vmatpush1.bf16.msra.mxu0 %v548
    %742 = vmatprep.subr.bf16.mxu0 0
    %743 = vmatpush1.bf16.msra.mxu0 %v549
    %744 = vmatprep.mubr.bf16.mxu0 %v235
    %745 = vmatmul.mubr.bf16.gmra.mrb[0].mxu0 %v234
    %v746 = vpop.f32.mrb[0].mxu0
    %v747 = vadd.f32 %v706, %v746
    %v748 = vpop.f32.mrb[0].mxu0
    %v749 = vpop.f32.mrb[0].mxu0
    %v750 = vadd.f32 %v709, %v749
    %v751 = vpop.f32.mrb[0].mxu0
    %752 = vdwg.mxu0
    %753 = vmatprep.subr.bf16.mxu0 0
    %754 = vmatpush1.bf16.msra.mxu0 %v550
    %755 = vmatprep.subr.bf16.mxu0 0
    %756 = vmatpush1.bf16.msra.mxu0 %v551
    %757 = vmatprep.subr.bf16.mxu0 0
    %758 = vmatpush1.bf16.msra.mxu0 %v552
    %759 = vmatprep.subr.bf16.mxu0 0
    %760 = vmatpush1.bf16.msra.mxu0 %v553
    %761 = vmatprep.subr.bf16.mxu0 0
    %762 = vmatpush1.bf16.msra.mxu0 %v554
    %763 = vmatprep.subr.bf16.mxu0 0
    %764 = vmatpush1.bf16.msra.mxu0 %v555
    %765 = vmatprep.subr.bf16.mxu0 0
    %766 = vmatpush1.bf16.msra.mxu0 %v556
    %767 = vmatprep.subr.bf16.mxu0 0
    %768 = vmatpush1.bf16.msra.mxu0 %v557
    %769 = vmatprep.subr.bf16.mxu0 0
    %770 = vmatpush1.bf16.msra.mxu0 %v558
    %771 = vmatprep.subr.bf16.mxu0 0
    %772 = vmatpush1.bf16.msra.mxu0 %v559
    %773 = vmatprep.subr.bf16.mxu0 0
    %774 = vmatpush1.bf16.msra.mxu0 %v560
    %775 = vmatprep.subr.bf16.mxu0 0
    %776 = vmatpush1.bf16.msra.mxu0 %v561
    %777 = vmatprep.subr.bf16.mxu0 0
    %778 = vmatpush1.bf16.msra.mxu0 %v562
    %779 = vmatprep.subr.bf16.mxu0 0
    %780 = vmatpush1.bf16.msra.mxu0 %v563
    %781 = vmatprep.subr.bf16.mxu0 0
    %782 = vmatpush1.bf16.msra.mxu0 %v564
    %783 = vmatprep.subr.bf16.mxu0 0
    %784 = vmatpush1.bf16.msra.mxu0 %v565
    %785 = vmatprep.mubr.bf16.mxu0 %v237
    %786 = vmatmul.mubr.bf16.gmra.mrb[0].mxu0 %v236
    %v787 = vpop.f32.mrb[0].mxu0
    %v788 = vadd.f32 %v747, %v787
    %v789 = vpop.f32.mrb[0].mxu0
    %v790 = vpop.f32.mrb[0].mxu0
    %v791 = vadd.f32 %v750, %v790
    %v792 = vpop.f32.mrb[0].mxu0
    %793 = vdwg.mxu0
    %v794 = vmax.f32 %v788, 0.0
    %v795 = vmax.f32 %v791, 0.0
    %v796 = vpack.c.bf16 %v795, %v794
    %v797 = vld [vmem:[#allocation7] sm:$0xf]
    %v798 = vld [vmem:[#allocation7 + $0x4] sm:$0xf]
    %v799 = vld [vmem:[#allocation7 + $0x8] sm:$0xf]
    %v800 = vld [vmem:[#allocation7 + $0xc] sm:$0xf]
    %v801 = vld [vmem:[#allocation7 + $0x10] sm:$0xf]
    %v802 = vld [vmem:[#allocation7 + $0x14] sm:$0xf]
    %v803 = vld [vmem:[#allocation7 + $0x18] sm:$0xf]
    %v804 = vld [vmem:[#allocation7 + $0x1c] sm:$0xf]
    %v805 = vld [vmem:[#allocation7 + $0x20] sm:$0xf]
    %v806 = vld [vmem:[#allocation7 + $0x24] sm:$0xf]
    %v807 = vld [vmem:[#allocation7 + $0x28] sm:$0xf]
    %v808 = vld [vmem:[#allocation7 + $0x2c] sm:$0xf]
    %v809 = vld [vmem:[#allocation7 + $0x30] sm:$0xf]
    %v810 = vld [vmem:[#allocation7 + $0x34] sm:$0xf]
    %v811 = vld [vmem:[#allocation7 + $0x38] sm:$0xf]
    %v812 = vld [vmem:[#allocation7 + $0x3c] sm:$0xf]
    %v813 = vld [vmem:[%s4] sm:$0x1]
    %v815 = vlaneseq
    %v816 = vshrl.u32 %v815, 7
    %v817 = vsub.s32 0, %v816
    %v818 = vrot.slane %v813, %v817
    %v836 = vunpack.c.l.b16 %v797
    %v837 = vunpack.c.l.b16 %v798
    %v838 = vunpack.c.l.b16 %v799
    %v839 = vunpack.c.l.b16 %v800
    %v840 = vunpack.c.l.b16 %v801
    %v841 = vunpack.c.l.b16 %v802
    %v842 = vunpack.c.l.b16 %v803
    %v843 = vunpack.c.l.b16 %v804
    %v844 = vunpack.c.l.b16 %v805
    %v845 = vunpack.c.l.b16 %v806
    %v846 = vunpack.c.l.b16 %v807
    %v847 = vunpack.c.l.b16 %v808
    %v848 = vunpack.c.l.b16 %v809
    %v849 = vunpack.c.l.b16 %v810
    %v850 = vunpack.c.l.b16 %v811
    %v851 = vunpack.c.l.b16 %v812
    %v852 = vpack.c.b16 %v837, %v836
    %v853 = vpack.c.b16 %v839, %v838
    %v854 = vpack.c.b16 %v841, %v840
    %v855 = vpack.c.b16 %v843, %v842
    %v856 = vpack.c.b16 %v845, %v844
    %v857 = vpack.c.b16 %v847, %v846
    %v858 = vpack.c.b16 %v849, %v848
    %v859 = vpack.c.b16 %v851, %v850
    %868 = vmatprep.subr.bf16.mxu0 0
    %869 = vmatpush1.bf16.msra.mxu0 %v852
    %870 = vmatprep.subr.bf16.mxu0 0
    %871 = vmatpush1.bf16.msra.mxu0 %v853
    %872 = vmatprep.subr.bf16.mxu0 0
    %873 = vmatpush1.bf16.msra.mxu0 %v854
    %874 = vmatprep.subr.bf16.mxu0 0
    %875 = vmatpush1.bf16.msra.mxu0 %v855
    %876 = vmatprep.subr.bf16.mxu0 0
    %877 = vmatpush1.bf16.msra.mxu0 %v856
    %878 = vmatprep.subr.bf16.mxu0 0
    %879 = vmatpush1.bf16.msra.mxu0 %v857
    %880 = vmatprep.subr.bf16.mxu0 0
    %881 = vmatpush1.bf16.msra.mxu0 %v858
    %882 = vmatprep.subr.bf16.mxu0 0
    %883 = vmatpush1.bf16.msra.mxu0 %v859
    %884 = vmatprep.subr.bf16.mxu0 0
    %885 = vmatpush1.bf16.msra.mxu0 0
    %886 = vmatprep.subr.bf16.mxu0 0
    %887 = vmatpush1.bf16.msra.mxu0 0
    %888 = vmatprep.subr.bf16.mxu0 0
    %889 = vmatpush1.bf16.msra.mxu0 0
    %890 = vmatprep.subr.bf16.mxu0 0
    %891 = vmatpush1.bf16.msra.mxu0 0
    %892 = vmatprep.subr.bf16.mxu0 0
    %893 = vmatpush1.bf16.msra.mxu0 0
    %894 = vmatprep.subr.bf16.mxu0 0
    %895 = vmatpush1.bf16.msra.mxu0 0
    %896 = vmatprep.subr.bf16.mxu0 0
    %897 = vmatpush1.bf16.msra.mxu0 0
    %898 = vmatprep.subr.bf16.mxu0 0
    %899 = vmatpush1.bf16.msra.mxu0 0
    %900 = vmatprep.mubr.bf16.mxu0 0
    %901 = vmatmul.mubr.bf16.gmra.mrb[0].mxu0 %v796
    %v902 = vpop.f32.mrb[0].mxu0
    %v903 = vadd.f32 %v818, %v902
    %v904 = vpop.f32.mrb[0].mxu0
    %v905 = vpop.f32.mrb[0].mxu0
    %v906 = vadd.f32 %v818, %v905
    %v907 = vpop.f32.mrb[0].mxu0
    %908 = vdwg.mxu0
    %909 = vst [vmem:[#allocation8] sm:$0xff] %v903
    %910 = vst [vmem:[#allocation8 + $0x8] sm:$0xff] %v906
    // Predicated region
    $region34: #{tpu_custom_call.1} parent=1 // pred_check
      _
    $region35: #{tpu_custom_call.1} parent=1 // pred_check_branch
      %912 = sbr.rel (0) target = $region37
    $region36: #{tpu_custom_call.1} parent=1 // pred_region
      %s914 = ssub.s32 256, 256
      %915 = vsyncadd [#allocation4], %s914
      %s916 = sshll.u32 [#allocation8], 4
      %s917 = int_to_ptr.vmem [resolvable:$true] %s916
      %922 = dma.vmem_to_hbm [thread:$0]  %s917, 256, %s5, [#allocation4], 128, 128, 8
    $region37: #{tpu_custom_call.1} parent=1 // pred_fallthru
      _
    // Predicated region
    $region38: #{tpu_custom_call.1} parent=1 // pred_check
      _
    $region39: #{tpu_custom_call.1} parent=1 // pred_check_branch
      %924 = sbr.rel (0) target = $region41
    $region40: #{tpu_custom_call.1} parent=1 // pred_region
      %925 = dma.done [#allocation4], 256
    $region41: #{tpu_custom_call.1} parent=1 // pred_fallthru
      _
    %926 = vsyncpa [#allocation3], 1
    %927 = vsyncpa [#allocation6], 1
    %928 = vsyncpa [#allocation4], 1

</llo_original>
